<compile_context>
chip_gen: v6e
topology: v6e:2x2x1
jax: 0.10.0
libtpu: 0.0.40
codegen_flags: <defaults>
</compile_context>

<pallas_src>
import functools

import jax
import jax.numpy as jnp
from jax.experimental import pallas as pl
from jax.experimental.pallas import tpu as pltpu


# --------------------------------------------------------------------------- kernel


def _time2vec_kernel(x_ref, w_ref, b_ref, m_ref, o_ref):
    # x_ref: (bm, F*pack)   w_ref: (F*pack, E*pack)   b_ref/m_ref: (1, E*pack)
    # o_ref: (bm, E*pack)
    w = w_ref[...]
    x = x_ref[...].astype(w.dtype)                  # in-kernel cast (torch's x.float())
    y = jnp.dot(x, w, preferred_element_type=jnp.float32)
    y = y + b_ref[...]                              # (1, E*pack) broadcast, f32
    is_linear = m_ref[...] > 0.0                    # precomputed mask: col % E == 0
    out = jnp.where(is_linear, y, jnp.sin(y))
    o_ref[...] = out.astype(o_ref.dtype)


# ------------------------------------------------------------------- packing helpers


def _choose_pack(time_feat_dim, time_emb_dim):
    """Lane-packing factor: how many logical rows share one packed row."""
    F, E = time_feat_dim, time_emb_dim
    if 128 % F == 0 and (E * (128 // F)) % 128 == 0:
        return 128 // F                  # input AND output blocks lane-dense (best)
    if 128 % E == 0:
        return 128 // E                  # output lane-dense only
    return 1                             # lane-sparse fallback: correct but slower


def pack_time2vec_params(w_full, b_full, *, pack, weight_dtype=jnp.float32):
    """Pack the fused (F, E) weight / (E,) bias for a given lane-packing factor.

    Call ONCE at init time (hoisted out of the per-forward path). Pass
    weight_dtype=jnp.bfloat16 on v5e if using a large pack with the block-diag weight.
    """
    F, E = w_full.shape
    wp = jnp.kron(jnp.eye(pack, dtype=jnp.float32),
                  w_full.astype(jnp.float32)).astype(weight_dtype)       # (F*pack, E*pack)
    bp = jnp.tile(b_full.astype(jnp.float32).reshape(1, E), (1, pack))   # (1, E*pack)
    col = jnp.arange(E * pack, dtype=jnp.int32) % E
    maskp = (col == 0).astype(jnp.float32).reshape(1, E * pack)          # 1.0 on linear col
    return wp, bp, maskp


# ------------------------------------------------------------------------ entry point


def time2vec_pallas(x, wp, bp, maskp, *, rows_per_tile=65536, out_dtype=jnp.float32):
    """x: [B, L, F]; wp/bp/maskp from pack_time2vec_params. Returns [B, L, E]."""
    B, L, F = x.shape
    Fp, Ep = wp.shape
    pack = Fp // F
    E = Ep // pack
    M = B * L

    # ---- tiling: big tiles (amortize per-step overhead), keep >=2 steps when possible
    align = 8 * pack                                     # packed block needs >=8 sublanes
    M_al = pl.cdiv(M, align) * align
    tm = max(align, (min(rows_per_tile, M_al) // align) * align)
    if M_al >= 2 * align and tm > M_al // 2:             # keep both v7x TensorCores busy
        tm = max(align, (M_al // (2 * align)) * align)
    M_pad = pl.cdiv(M_al, tm) * tm
    grid = M_pad // tm
    bm = tm // pack                                      # packed rows per tile

    # ---- wrapper-side packing of x (row-major reshapes; pad only if misaligned) ----
    x2 = x.reshape(M, F)
    if M_pad != M:
        x2 = jnp.pad(x2, ((0, M_pad - M), (0, 0)))
    xp = x2.reshape(M_pad // pack, Fp)

    # ---- VMEM budget: double-buffered in/out tiles + resident params (+ margin) ----
    in_bytes = bm * Fp * jnp.dtype(x.dtype).itemsize
    out_bytes = bm * Ep * jnp.dtype(out_dtype).itemsize
    fixed_bytes = Fp * Ep * jnp.dtype(wp.dtype).itemsize + 2 * Ep * 4
    vmem_limit = int(1.25 * (2 * (in_bytes + out_bytes) + fixed_bytes)) + (2 << 20)
    vmem_limit = min(vmem_limit, 64 << 20)

    cost = pl.CostEstimate(
        flops=2 * M_pad * F * E,
        transcendentals=M_pad * (E - 1),
        bytes_accessed=(M_pad * F * jnp.dtype(x.dtype).itemsize
                        + M_pad * E * jnp.dtype(out_dtype).itemsize
                        + Fp * Ep * jnp.dtype(wp.dtype).itemsize),
    )

    out = pl.pallas_call(
        _time2vec_kernel,
        out_shape=jax.ShapeDtypeStruct((M_pad // pack, Ep), out_dtype),
        grid_spec=pltpu.PrefetchScalarGridSpec(
            num_scalar_prefetch=0,
            grid=(grid,),
            in_specs=[
                pl.BlockSpec((bm, Fp), lambda i: (i, 0)),   # packed x tile (lane-dense)
                pl.BlockSpec((Fp, Ep), lambda i: (0, 0)),   # fused block-diag weight
                pl.BlockSpec((1, Ep), lambda i: (0, 0)),    # fused bias
                pl.BlockSpec((1, Ep), lambda i: (0, 0)),    # linear-column mask
            ],
            out_specs=pl.BlockSpec((bm, Ep), lambda i: (i, 0)),  # lane-dense output tile
        ),
        compiler_params=pltpu.CompilerParams(
            dimension_semantics=("parallel",),               # shard steps across TCs
            vmem_limit_bytes=vmem_limit,
        ),
        cost_estimate=cost,
    )(xp, wp, bp, maskp)

    out = out.reshape(M_pad, E)[:M]
    return out.reshape(B, L, E)


# ------------------------------------------------------------------ init + reference


def init_time2vec_params(key, time_feat_dim, time_emb_dim):
    """Deterministic init mimicking nn.Linear's U(-1/sqrt(fan_in), 1/sqrt(fan_in))."""
    k1, k2, k3, k4 = jax.random.split(key, 4)
    bound = 1.0 / jnp.sqrt(time_feat_dim)
    w_periodic = jax.random.uniform(k1, (time_feat_dim, time_emb_dim - 1),
                                    minval=-bound, maxval=bound, dtype=jnp.float32)
    b_periodic = jax.random.uniform(k2, (time_emb_dim - 1,),
                                    minval=-bound, maxval=bound, dtype=jnp.float32)
    w_nonper = jax.random.uniform(k3, (time_feat_dim, 1),
                                  minval=-bound, maxval=bound, dtype=jnp.float32)
    b_nonper = jax.random.uniform(k4, (1,),
                                  minval=-bound, maxval=bound, dtype=jnp.float32)
    # Fuse: column 0 = non-periodic, columns 1: = periodic (matches torch.cat order).
    w_full = jnp.concatenate([w_nonper, w_periodic], axis=1)   # (F, E)
    b_full = jnp.concatenate([b_nonper, b_periodic], axis=0)   # (E,)
    return w_full, b_full


def time2vec_ref(x, w, b):
    """Plain-JAX reference (mirrors the PyTorch forward)."""
    y = jnp.einsum("blf,fe->ble", x.astype(jnp.float32), w) + b
    non_periodic = y[..., :1]
    periodic = jnp.sin(y[..., 1:])
    return jnp.concatenate([non_periodic, periodic], axis=-1)


if __name__ == "__main__":
    key = jax.random.PRNGKey(0)
    k_x, k_p = jax.random.split(key)

    B, L = 2, 8                 # batch, seq
    time_feat_dim = 4           # freq='h'
    time_emb_dim = 32

    x = jax.random.normal(k_x, (B, L, time_feat_dim), dtype=jnp.float32)
    w_full, b_full = init_time2vec_params(k_p, time_feat_dim, time_emb_dim)

    # Hoisted (init-time) parameter packing: pack=32 -> input & output lane-dense.
    pack = _choose_pack(time_feat_dim, time_emb_dim)
    wp, bp, maskp = pack_time2vec_params(w_full, b_full, pack=pack)

    fwd = jax.jit(functools.partial(time2vec_pallas, rows_per_tile=65536))
    out = jax.block_until_ready(fwd(x, wp, bp, maskp))

    ref = time2vec_ref(x, w_full, b_full)
    assert out.shape == (B, L, time_emb_dim)
    assert jnp.allclose(out, ref, atol=1e-5, rtol=1e-5)

    print("KERNEL_OK")
</pallas_src>

<mosaic_0001>
module attributes {stable_mosaic.version = 11 : i64} {
  func.func @_time2vec_kernel(%arg0: i32, %arg1: memref<8x128xf32, #tpu.memory_space<vmem>>, %arg2: memref<128x1024xf32, #tpu.memory_space<vmem>>, %arg3: memref<1x1024xf32, #tpu.memory_space<vmem>>, %arg4: memref<1x1024xf32, #tpu.memory_space<vmem>>, %arg5: memref<8x1024xf32, #tpu.memory_space<vmem>>) attributes {dimension_semantics = [#tpu.dimension_semantics<parallel>], iteration_bounds = array<i64: 1>, scalar_prefetch = 0 : i64, scratch_operands = 0 : i64, tpu.core_type = #tpu.core_type<tc>, window_params = [{transform_indices = @transform_0, window_bounds = array<i64: 8, 128>}, {pipeline_mode = #tpu.pipeline_mode<synchronous>, transform_indices = @transform_1, window_bounds = array<i64: 128, 1024>}, {pipeline_mode = #tpu.pipeline_mode<synchronous>, transform_indices = @transform_2, window_bounds = array<i64: 1, 1024>}, {pipeline_mode = #tpu.pipeline_mode<synchronous>, transform_indices = @transform_3, window_bounds = array<i64: 1, 1024>}, {transform_indices = @transform_4, window_bounds = array<i64: 8, 1024>}]} {
    %c0 = arith.constant 0 : index
    %c0_0 = arith.constant 0 : index
    %0 = vector.load %arg2[%c0, %c0_0] : memref<128x1024xf32, #tpu.memory_space<vmem>>, vector<128x1024xf32>
    %c0_1 = arith.constant 0 : index
    %c0_2 = arith.constant 0 : index
    %1 = vector.load %arg1[%c0_1, %c0_2] : memref<8x128xf32, #tpu.memory_space<vmem>>, vector<8x128xf32>
    %cst = arith.constant dense<0.000000e+00> : vector<8x1024xf32>
    %2 = tpu.matmul %1, %0, %cst {dimension_numbers = #tpu.dot_dimension_numbers<[1], [0], [0], [1], [0, 0, 1, 1], [], []>} : vector<8x128xf32>, vector<128x1024xf32>, vector<8x1024xf32> -> vector<8x1024xf32>
    %c0_3 = arith.constant 0 : index
    %c0_4 = arith.constant 0 : index
    %3 = vector.load %arg3[%c0_3, %c0_4] : memref<1x1024xf32, #tpu.memory_space<vmem>>, vector<1x1024xf32>
    %4 = vector.broadcast %3 : vector<1x1024xf32> to vector<8x1024xf32>
    %5 = arith.addf %2, %4 : vector<8x1024xf32>
    %c0_5 = arith.constant 0 : index
    %c0_6 = arith.constant 0 : index
    %6 = vector.load %arg4[%c0_5, %c0_6] : memref<1x1024xf32, #tpu.memory_space<vmem>>, vector<1x1024xf32>
    %cst_7 = arith.constant 0.000000e+00 : f32
    %7 = vector.broadcast %cst_7 : f32 to vector<1x1024xf32>
    %8 = arith.cmpf ogt, %6, %7 : vector<1x1024xf32>
    %9 = math.sin %5 : vector<8x1024xf32>
    %10 = vector.shape_cast %8 : vector<1x1024xi1> to vector<1x1024xi1>
    %11 = vector.broadcast %10 : vector<1x1024xi1> to vector<8x1024xi1>
    %12 = arith.select %11, %5, %9 : vector<8x1024xi1>, vector<8x1024xf32>
    %c0_8 = arith.constant 0 : index
    %c0_9 = arith.constant 0 : index
    %13 = vector.load %arg5[%c0_8, %c0_9] : memref<8x1024xf32, #tpu.memory_space<vmem>>, vector<8x1024xf32>
    tpu.vector_store %arg5[%c0_8, %c0_9], %12 {strides = array<i32>} : memref<8x1024xf32, #tpu.memory_space<vmem>>, vector<8x1024xf32>,
    return
  }
  func.func @transform_0(%arg0: i32) -> (i32, i32) {
    %c0_i32 = arith.constant 0 : i32
    %c0_i32_0 = arith.constant 0 : i32
    return %arg0, %c0_i32 : i32, i32
  }
  func.func @transform_1(%arg0: i32) -> (i32, i32) {
    %c0_i32 = arith.constant 0 : i32
    %c0_i32_0 = arith.constant 0 : i32
    %c0_i32_1 = arith.constant 0 : i32
    return %c0_i32, %c0_i32_0 : i32, i32
  }
  func.func @transform_2(%arg0: i32) -> (i32, i32) {
    %c0_i32 = arith.constant 0 : i32
    %c0_i32_0 = arith.constant 0 : i32
    %c0_i32_1 = arith.constant 0 : i32
    return %c0_i32, %c0_i32_0 : i32, i32
  }
  func.func @transform_3(%arg0: i32) -> (i32, i32) {
    %c0_i32 = arith.constant 0 : i32
    %c0_i32_0 = arith.constant 0 : i32
    %c0_i32_1 = arith.constant 0 : i32
    return %c0_i32, %c0_i32_0 : i32, i32
  }
  func.func @transform_4(%arg0: i32) -> (i32, i32) {
    %c0_i32 = arith.constant 0 : i32
    %c0_i32_0 = arith.constant 0 : i32
    return %arg0, %c0_i32 : i32, i32
  }
}

</mosaic_0001>

<llo_original>
// kernel: time2vec_pallas.1
$region0: #{time2vec_pallas.1}
  #allocation0 [shape = 'u32[]', space=smem, size = 0x4, offset = 0x4, fixed_abs, tag = 'smem constant byte address 0x4 - core index']
  #allocation1 [shape = 'u32[144,128]{1,0:T(1,128)}', space=vmem, size = 0x12000, scoped, tag = 'internal scratch']
  %s0 = inlined_call_operand.vmem [shape: f32[8,128], index: 0, kind: input, shape index: {}]
  %s1 = inlined_call_operand.hbm [shape: f32[128,1024], index: 1, kind: input, shape index: {}]
  %s2 = inlined_call_operand.vmem [shape: f32[1,1024], index: 2, kind: input, shape index: {}]
  %s3 = inlined_call_operand.vmem [shape: f32[1,1024], index: 3, kind: input, shape index: {}]
  %s4 = inlined_call_operand.vmem [shape: f32[8,1024], index: 4, kind: output, shape index: {}]
  %s5 = sld [smem:[#allocation0]]
  $region30: #{time2vec_pallas.1} parent=0
    _
  %s7 = ssub.s32 1, %s5
  %s8 = scalar_select 0, %s7, %s5
  $region1: #{time2vec_pallas.1} parent=0
    #allocation2 [shape = 'u8[524288]{0}', space=vmem, size = 0x80000, scoped, tag = 'input window, operand 1, single buffered']
    #allocation3 [shape = 's32[1]{0}', space=sflag, size = 0x4, scoped, tag = 'scoped memory for time2vec_pallas.1']
    %9 = vsyncpa [#allocation3], 0
    // Predicated region
    $region2: #{time2vec_pallas.1} parent=1 // pred_check
      _
    $region3: #{time2vec_pallas.1} parent=1 // pred_check_branch
      %11 = sbr.rel (0) target = $region5
    $region4: #{time2vec_pallas.1} parent=1 // pred_region
      _
    $region5: #{time2vec_pallas.1} parent=1 // pred_fallthru
      _
    // Predicated region
    $region6: #{time2vec_pallas.1} parent=1 // pred_check
      _
    $region7: #{time2vec_pallas.1} parent=1 // pred_check_branch
      %13 = sbr.rel (0) target = $region9
    $region8: #{time2vec_pallas.1} parent=1 // pred_region
      %s15 = ssub.s32 16384, 16384
      %16 = vsyncadd [#allocation3], %s15
      %s17 = sshll.u32 [#allocation2], 4
      %s18 = int_to_ptr.vmem [resolvable:$true] %s17
      %23 = dma.hbm_to_vmem [thread:$0]  %s1, 16384, %s18, [#allocation3], 1024, 1024, 64
    $region9: #{time2vec_pallas.1} parent=1 // pred_fallthru
      _
    // Predicated region
    $region10: #{time2vec_pallas.1} parent=1 // pred_check
      _
    $region11: #{time2vec_pallas.1} parent=1 // pred_check_branch
      %25 = sbr.rel (0) target = $region13
    $region12: #{time2vec_pallas.1} parent=1 // pred_region
      _
    $region13: #{time2vec_pallas.1} parent=1 // pred_fallthru
      _
    // Predicated region
    $region14: #{time2vec_pallas.1} parent=1 // pred_check
      _
    $region15: #{time2vec_pallas.1} parent=1 // pred_check_branch
      %27 = sbr.rel (0) target = $region17
    $region16: #{time2vec_pallas.1} parent=1 // pred_region
      _
    $region17: #{time2vec_pallas.1} parent=1 // pred_fallthru
      _
    // Predicated region
    $region18: #{time2vec_pallas.1} parent=1 // pred_check
      _
    $region19: #{time2vec_pallas.1} parent=1 // pred_check_branch
      %29 = sbr.rel (0) target = $region21
    $region20: #{time2vec_pallas.1} parent=1 // pred_region
      %30 = dma.done [#allocation3], 16384
    $region21: #{time2vec_pallas.1} parent=1 // pred_fallthru
      _
    %v31 = vld [vmem:[#allocation2] sm:$0xff]
    %v32 = vld [vmem:[#allocation2 + $0x8] sm:$0xff]
    %v33 = vld [vmem:[#allocation2 + $0x10] sm:$0xff]
    %v34 = vld [vmem:[#allocation2 + $0x18] sm:$0xff]
    %v35 = vld [vmem:[#allocation2 + $0x20] sm:$0xff]
    %v36 = vld [vmem:[#allocation2 + $0x28] sm:$0xff]
    %v37 = vld [vmem:[#allocation2 + $0x30] sm:$0xff]
    %v38 = vld [vmem:[#allocation2 + $0x38] sm:$0xff]
    %v39 = vld [vmem:[#allocation2 + $0x40] sm:$0xff]
    %v40 = vld [vmem:[#allocation2 + $0x48] sm:$0xff]
    %v41 = vld [vmem:[#allocation2 + $0x50] sm:$0xff]
    %v42 = vld [vmem:[#allocation2 + $0x58] sm:$0xff]
    %v43 = vld [vmem:[#allocation2 + $0x60] sm:$0xff]
    %v44 = vld [vmem:[#allocation2 + $0x68] sm:$0xff]
    %v45 = vld [vmem:[#allocation2 + $0x70] sm:$0xff]
    %v46 = vld [vmem:[#allocation2 + $0x78] sm:$0xff]
    %v47 = vld [vmem:[#allocation2 + $0x80] sm:$0xff]
    %v48 = vld [vmem:[#allocation2 + $0x88] sm:$0xff]
    %v49 = vld [vmem:[#allocation2 + $0x90] sm:$0xff]
    %v50 = vld [vmem:[#allocation2 + $0x98] sm:$0xff]
    %v51 = vld [vmem:[#allocation2 + $0xa0] sm:$0xff]
    %v52 = vld [vmem:[#allocation2 + $0xa8] sm:$0xff]
    %v53 = vld [vmem:[#allocation2 + $0xb0] sm:$0xff]
    %v54 = vld [vmem:[#allocation2 + $0xb8] sm:$0xff]
    %v55 = vld [vmem:[#allocation2 + $0xc0] sm:$0xff]
    %v56 = vld [vmem:[#allocation2 + $0xc8] sm:$0xff]
    %v57 = vld [vmem:[#allocation2 + $0xd0] sm:$0xff]
    %v58 = vld [vmem:[#allocation2 + $0xd8] sm:$0xff]
    %v59 = vld [vmem:[#allocation2 + $0xe0] sm:$0xff]
    %v60 = vld [vmem:[#allocation2 + $0xe8] sm:$0xff]
    %v61 = vld [vmem:[#allocation2 + $0xf0] sm:$0xff]
    %v62 = vld [vmem:[#allocation2 + $0xf8] sm:$0xff]
    %v63 = vld [vmem:[#allocation2 + $0x100] sm:$0xff]
    %v64 = vld [vmem:[#allocation2 + $0x108] sm:$0xff]
    %v65 = vld [vmem:[#allocation2 + $0x110] sm:$0xff]
    %v66 = vld [vmem:[#allocation2 + $0x118] sm:$0xff]
    %v67 = vld [vmem:[#allocation2 + $0x120] sm:$0xff]
    %v68 = vld [vmem:[#allocation2 + $0x128] sm:$0xff]
    %v69 = vld [vmem:[#allocation2 + $0x130] sm:$0xff]
    %v70 = vld [vmem:[#allocation2 + $0x138] sm:$0xff]
    %v71 = vld [vmem:[#allocation2 + $0x140] sm:$0xff]
    %v72 = vld [vmem:[#allocation2 + $0x148] sm:$0xff]
    %v73 = vld [vmem:[#allocation2 + $0x150] sm:$0xff]
    %v74 = vld [vmem:[#allocation2 + $0x158] sm:$0xff]
    %v75 = vld [vmem:[#allocation2 + $0x160] sm:$0xff]
    %v76 = vld [vmem:[#allocation2 + $0x168] sm:$0xff]
    %v77 = vld [vmem:[#allocation2 + $0x170] sm:$0xff]
    %v78 = vld [vmem:[#allocation2 + $0x178] sm:$0xff]
    %v79 = vld [vmem:[#allocation2 + $0x180] sm:$0xff]
    %v80 = vld [vmem:[#allocation2 + $0x188] sm:$0xff]
    %v81 = vld [vmem:[#allocation2 + $0x190] sm:$0xff]
    %v82 = vld [vmem:[#allocation2 + $0x198] sm:$0xff]
    %v83 = vld [vmem:[#allocation2 + $0x1a0] sm:$0xff]
    %v84 = vld [vmem:[#allocation2 + $0x1a8] sm:$0xff]
    %v85 = vld [vmem:[#allocation2 + $0x1b0] sm:$0xff]
    %v86 = vld [vmem:[#allocation2 + $0x1b8] sm:$0xff]
    %v87 = vld [vmem:[#allocation2 + $0x1c0] sm:$0xff]
    %v88 = vld [vmem:[#allocation2 + $0x1c8] sm:$0xff]
    %v89 = vld [vmem:[#allocation2 + $0x1d0] sm:$0xff]
    %v90 = vld [vmem:[#allocation2 + $0x1d8] sm:$0xff]
    %v91 = vld [vmem:[#allocation2 + $0x1e0] sm:$0xff]
    %v92 = vld [vmem:[#allocation2 + $0x1e8] sm:$0xff]
    %v93 = vld [vmem:[#allocation2 + $0x1f0] sm:$0xff]
    %v94 = vld [vmem:[#allocation2 + $0x1f8] sm:$0xff]
    %v95 = vld [vmem:[#allocation2 + $0x200] sm:$0xff]
    %v96 = vld [vmem:[#allocation2 + $0x208] sm:$0xff]
    %v97 = vld [vmem:[#allocation2 + $0x210] sm:$0xff]
    %v98 = vld [vmem:[#allocation2 + $0x218] sm:$0xff]
    %v99 = vld [vmem:[#allocation2 + $0x220] sm:$0xff]
    %v100 = vld [vmem:[#allocation2 + $0x228] sm:$0xff]
    %v101 = vld [vmem:[#allocation2 + $0x230] sm:$0xff]
    %v102 = vld [vmem:[#allocation2 + $0x238] sm:$0xff]
    %v103 = vld [vmem:[#allocation2 + $0x240] sm:$0xff]
    %v104 = vld [vmem:[#allocation2 + $0x248] sm:$0xff]
    %v105 = vld [vmem:[#allocation2 + $0x250] sm:$0xff]
    %v106 = vld [vmem:[#allocation2 + $0x258] sm:$0xff]
    %v107 = vld [vmem:[#allocation2 + $0x260] sm:$0xff]
    %v108 = vld [vmem:[#allocation2 + $0x268] sm:$0xff]
    %v109 = vld [vmem:[#allocation2 + $0x270] sm:$0xff]
    %v110 = vld [vmem:[#allocation2 + $0x278] sm:$0xff]
    %v111 = vld [vmem:[#allocation2 + $0x280] sm:$0xff]
    %v112 = vld [vmem:[#allocation2 + $0x288] sm:$0xff]
    %v113 = vld [vmem:[#allocation2 + $0x290] sm:$0xff]
    %v114 = vld [vmem:[#allocation2 + $0x298] sm:$0xff]
    %v115 = vld [vmem:[#allocation2 + $0x2a0] sm:$0xff]
    %v116 = vld [vmem:[#allocation2 + $0x2a8] sm:$0xff]
    %v117 = vld [vmem:[#allocation2 + $0x2b0] sm:$0xff]
    %v118 = vld [vmem:[#allocation2 + $0x2b8] sm:$0xff]
    %v119 = vld [vmem:[#allocation2 + $0x2c0] sm:$0xff]
    %v120 = vld [vmem:[#allocation2 + $0x2c8] sm:$0xff]
    %v121 = vld [vmem:[#allocation2 + $0x2d0] sm:$0xff]
    %v122 = vld [vmem:[#allocation2 + $0x2d8] sm:$0xff]
    %v123 = vld [vmem:[#allocation2 + $0x2e0] sm:$0xff]
    %v124 = vld [vmem:[#allocation2 + $0x2e8] sm:$0xff]
    %v125 = vld [vmem:[#allocation2 + $0x2f0] sm:$0xff]
    %v126 = vld [vmem:[#allocation2 + $0x2f8] sm:$0xff]
    %v127 = vld [vmem:[#allocation2 + $0x300] sm:$0xff]
    %v128 = vld [vmem:[#allocation2 + $0x308] sm:$0xff]
    %v129 = vld [vmem:[#allocation2 + $0x310] sm:$0xff]
    %v130 = vld [vmem:[#allocation2 + $0x318] sm:$0xff]
    %v131 = vld [vmem:[#allocation2 + $0x320] sm:$0xff]
    %v132 = vld [vmem:[#allocation2 + $0x328] sm:$0xff]
    %v133 = vld [vmem:[#allocation2 + $0x330] sm:$0xff]
    %v134 = vld [vmem:[#allocation2 + $0x338] sm:$0xff]
    %v135 = vld [vmem:[#allocation2 + $0x340] sm:$0xff]
    %v136 = vld [vmem:[#allocation2 + $0x348] sm:$0xff]
    %v137 = vld [vmem:[#allocation2 + $0x350] sm:$0xff]
    %v138 = vld [vmem:[#allocation2 + $0x358] sm:$0xff]
    %v139 = vld [vmem:[#allocation2 + $0x360] sm:$0xff]
    %v140 = vld [vmem:[#allocation2 + $0x368] sm:$0xff]
    %v141 = vld [vmem:[#allocation2 + $0x370] sm:$0xff]
    %v142 = vld [vmem:[#allocation2 + $0x378] sm:$0xff]
    %v143 = vld [vmem:[#allocation2 + $0x380] sm:$0xff]
    %v144 = vld [vmem:[#allocation2 + $0x388] sm:$0xff]
    %v145 = vld [vmem:[#allocation2 + $0x390] sm:$0xff]
    %v146 = vld [vmem:[#allocation2 + $0x398] sm:$0xff]
    %v147 = vld [vmem:[#allocation2 + $0x3a0] sm:$0xff]
    %v148 = vld [vmem:[#allocation2 + $0x3a8] sm:$0xff]
    %v149 = vld [vmem:[#allocation2 + $0x3b0] sm:$0xff]
    %v150 = vld [vmem:[#allocation2 + $0x3b8] sm:$0xff]
    %v151 = vld [vmem:[#allocation2 + $0x3c0] sm:$0xff]
    %v152 = vld [vmem:[#allocation2 + $0x3c8] sm:$0xff]
    %v153 = vld [vmem:[#allocation2 + $0x3d0] sm:$0xff]
    %v154 = vld [vmem:[#allocation2 + $0x3d8] sm:$0xff]
    %v155 = vld [vmem:[#allocation2 + $0x3e0] sm:$0xff]
    %v156 = vld [vmem:[#allocation2 + $0x3e8] sm:$0xff]
    %v157 = vld [vmem:[#allocation2 + $0x3f0] sm:$0xff]
    %v158 = vld [vmem:[#allocation2 + $0x3f8] sm:$0xff]
    %v159 = vld [vmem:[%s0] sm:$0xff]
    %v160 = vld [vmem:[%s2] sm:$0xff]
    %v162 = vlaneseq
    %v163 = vshrl.u32 %v162, 7
    %v164 = vsub.s32 0, %v163
    %v165 = vrot.slane %v160, %v164
    %v166 = vlaneseq
    %v167 = vshrl.u32 %v166, 7
    %v168 = vsub.s32 1, %v167
    %v169 = vrot.slane %v160, %v168
    %v170 = vlaneseq
    %v171 = vshrl.u32 %v170, 7
    %v172 = vsub.s32 2, %v171
    %v173 = vrot.slane %v160, %v172
    %v174 = vlaneseq
    %v175 = vshrl.u32 %v174, 7
    %v176 = vsub.s32 3, %v175
    %v177 = vrot.slane %v160, %v176
    %v178 = vlaneseq
    %v179 = vshrl.u32 %v178, 7
    %v180 = vsub.s32 4, %v179
    %v181 = vrot.slane %v160, %v180
    %v182 = vlaneseq
    %v183 = vshrl.u32 %v182, 7
    %v184 = vsub.s32 5, %v183
    %v185 = vrot.slane %v160, %v184
    %v186 = vlaneseq
    %v187 = vshrl.u32 %v186, 7
    %v188 = vsub.s32 6, %v187
    %v189 = vrot.slane %v160, %v188
    %v190 = vlaneseq
    %v191 = vshrl.u32 %v190, 7
    %v192 = vsub.s32 7, %v191
    %v193 = vrot.slane %v160, %v192
    %202 = vmatprep.subr.mxu0 %v152
    %203 = vmatpush1.msra.mxu0 %v151
    %204 = vmatprep.subr.mxu0 %v144
    %205 = vmatpush1.msra.mxu0 %v143
    %206 = vmatprep.subr.mxu0 %v136
    %207 = vmatpush1.msra.mxu0 %v135
    %208 = vmatprep.subr.mxu0 %v128
    %209 = vmatpush1.msra.mxu0 %v127
    %210 = vmatprep.subr.mxu0 %v120
    %211 = vmatpush1.msra.mxu0 %v119
    %212 = vmatprep.subr.mxu0 %v112
    %213 = vmatpush1.msra.mxu0 %v111
    %214 = vmatprep.subr.mxu0 %v104
    %215 = vmatpush1.msra.mxu0 %v103
    %216 = vmatprep.subr.mxu0 %v96
    %217 = vmatpush1.msra.mxu0 %v95
    %218 = vmatprep.subr.mxu0 %v88
    %219 = vmatpush1.msra.mxu0 %v87
    %220 = vmatprep.subr.mxu0 %v80
    %221 = vmatpush1.msra.mxu0 %v79
    %222 = vmatprep.subr.mxu0 %v72
    %223 = vmatpush1.msra.mxu0 %v71
    %224 = vmatprep.subr.mxu0 %v64
    %225 = vmatpush1.msra.mxu0 %v63
    %226 = vmatprep.subr.mxu0 %v56
    %227 = vmatpush1.msra.mxu0 %v55
    %228 = vmatprep.subr.mxu0 %v48
    %229 = vmatpush1.msra.mxu0 %v47
    %230 = vmatprep.subr.mxu0 %v40
    %231 = vmatpush1.msra.mxu0 %v39
    %232 = vmatprep.subr.mxu0 %v32
    %233 = vmatpush1.msra.mxu0 %v31
    %234 = vmatprep.subr.mxu0 0.0
    %235 = vmatpush2.msra.mxu0 0.0
    %236 = vmatprep.subr.mxu0 0.0
    %237 = vmatpush2.msra.mxu0 0.0
    %238 = vmatprep.subr.mxu0 0.0
    %239 = vmatpush2.msra.mxu0 0.0
    %240 = vmatprep.subr.mxu0 0.0
    %241 = vmatpush2.msra.mxu0 0.0
    %242 = vmatprep.subr.mxu0 0.0
    %243 = vmatpush2.msra.mxu0 0.0
    %244 = vmatprep.subr.mxu0 0.0
    %245 = vmatpush2.msra.mxu0 0.0
    %246 = vmatprep.subr.mxu0 0.0
    %247 = vmatpush2.msra.mxu0 0.0
    %248 = vmatprep.subr.mxu0 0.0
    %249 = vmatpush2.msra.mxu0 0.0
    %250 = vmatprep.subr.mxu0 0.0
    %251 = vmatpush2.msra.mxu0 0.0
    %252 = vmatprep.subr.mxu0 0.0
    %253 = vmatpush2.msra.mxu0 0.0
    %254 = vmatprep.subr.mxu0 0.0
    %255 = vmatpush2.msra.mxu0 0.0
    %256 = vmatprep.subr.mxu0 0.0
    %257 = vmatpush2.msra.mxu0 0.0
    %258 = vmatprep.subr.mxu0 0.0
    %259 = vmatpush2.msra.mxu0 0.0
    %260 = vmatprep.subr.mxu0 0.0
    %261 = vmatpush2.msra.mxu0 0.0
    %262 = vmatprep.subr.mxu0 0.0
    %263 = vmatpush2.msra.mxu0 0.0
    %264 = vmatprep.subr.mxu0 0.0
    %265 = vmatpush2.msra.mxu0 0.0
    %266 = vmatprep.mubr.f32.mxu0 0.0
    %267 = vmatmul.mubr.f32.gmra.mxu0 %v159
    %v268 = vpop.f32.mrf.mxu0
    %v269 = vadd.f32 %v165, %v268
    %v270 = vpop.f32.mrf.mxu0
    %v271 = vadd.f32 %v169, %v270
    %272 = vdwg.mxu0
    %273 = vmatprep.subr.mxu0 %v154
    %274 = vmatpush1.msra.mxu0 %v153
    %275 = vmatprep.subr.mxu0 %v146
    %276 = vmatpush1.msra.mxu0 %v145
    %277 = vmatprep.subr.mxu0 %v138
    %278 = vmatpush1.msra.mxu0 %v137
    %279 = vmatprep.subr.mxu0 %v130
    %280 = vmatpush1.msra.mxu0 %v129
    %281 = vmatprep.subr.mxu0 %v122
    %282 = vmatpush1.msra.mxu0 %v121
    %283 = vmatprep.subr.mxu0 %v114
    %284 = vmatpush1.msra.mxu0 %v113
    %285 = vmatprep.subr.mxu0 %v106
    %286 = vmatpush1.msra.mxu0 %v105
    %287 = vmatprep.subr.mxu0 %v98
    %288 = vmatpush1.msra.mxu0 %v97
    %289 = vmatprep.subr.mxu0 %v90
    %290 = vmatpush1.msra.mxu0 %v89
    %291 = vmatprep.subr.mxu0 %v82
    %292 = vmatpush1.msra.mxu0 %v81
    %293 = vmatprep.subr.mxu0 %v74
    %294 = vmatpush1.msra.mxu0 %v73
    %295 = vmatprep.subr.mxu0 %v66
    %296 = vmatpush1.msra.mxu0 %v65
    %297 = vmatprep.subr.mxu0 %v58
    %298 = vmatpush1.msra.mxu0 %v57
    %299 = vmatprep.subr.mxu0 %v50
    %300 = vmatpush1.msra.mxu0 %v49
    %301 = vmatprep.subr.mxu0 %v42
    %302 = vmatpush1.msra.mxu0 %v41
    %303 = vmatprep.subr.mxu0 %v34
    %304 = vmatpush1.msra.mxu0 %v33
    %305 = vmatprep.subr.mxu0 0.0
    %306 = vmatpush2.msra.mxu0 0.0
    %307 = vmatprep.subr.mxu0 0.0
    %308 = vmatpush2.msra.mxu0 0.0
    %309 = vmatprep.subr.mxu0 0.0
    %310 = vmatpush2.msra.mxu0 0.0
    %311 = vmatprep.subr.mxu0 0.0
    %312 = vmatpush2.msra.mxu0 0.0
    %313 = vmatprep.subr.mxu0 0.0
    %314 = vmatpush2.msra.mxu0 0.0
    %315 = vmatprep.subr.mxu0 0.0
    %316 = vmatpush2.msra.mxu0 0.0
    %317 = vmatprep.subr.mxu0 0.0
    %318 = vmatpush2.msra.mxu0 0.0
    %319 = vmatprep.subr.mxu0 0.0
    %320 = vmatpush2.msra.mxu0 0.0
    %321 = vmatprep.subr.mxu0 0.0
    %322 = vmatpush2.msra.mxu0 0.0
    %323 = vmatprep.subr.mxu0 0.0
    %324 = vmatpush2.msra.mxu0 0.0
    %325 = vmatprep.subr.mxu0 0.0
    %326 = vmatpush2.msra.mxu0 0.0
    %327 = vmatprep.subr.mxu0 0.0
    %328 = vmatpush2.msra.mxu0 0.0
    %329 = vmatprep.subr.mxu0 0.0
    %330 = vmatpush2.msra.mxu0 0.0
    %331 = vmatprep.subr.mxu0 0.0
    %332 = vmatpush2.msra.mxu0 0.0
    %333 = vmatprep.subr.mxu0 0.0
    %334 = vmatpush2.msra.mxu0 0.0
    %335 = vmatprep.subr.mxu0 0.0
    %336 = vmatpush2.msra.mxu0 0.0
    %337 = vmatprep.mubr.f32.mxu0 0.0
    %338 = vmatmul.mubr.f32.gmra.mxu0 %v159
    %v339 = vpop.f32.mrf.mxu0
    %v340 = vadd.f32 %v173, %v339
    %v341 = vpop.f32.mrf.mxu0
    %v342 = vadd.f32 %v177, %v341
    %343 = vdwg.mxu0
    %344 = vmatprep.subr.mxu0 %v156
    %345 = vmatpush1.msra.mxu0 %v155
    %346 = vmatprep.subr.mxu0 %v148
    %347 = vmatpush1.msra.mxu0 %v147
    %348 = vmatprep.subr.mxu0 %v140
    %349 = vmatpush1.msra.mxu0 %v139
    %350 = vmatprep.subr.mxu0 %v132
    %351 = vmatpush1.msra.mxu0 %v131
    %352 = vmatprep.subr.mxu0 %v124
    %353 = vmatpush1.msra.mxu0 %v123
    %354 = vmatprep.subr.mxu0 %v116
    %355 = vmatpush1.msra.mxu0 %v115
    %356 = vmatprep.subr.mxu0 %v108
    %357 = vmatpush1.msra.mxu0 %v107
    %358 = vmatprep.subr.mxu0 %v100
    %359 = vmatpush1.msra.mxu0 %v99
    %360 = vmatprep.subr.mxu0 %v92
    %361 = vmatpush1.msra.mxu0 %v91
    %362 = vmatprep.subr.mxu0 %v84
    %363 = vmatpush1.msra.mxu0 %v83
    %364 = vmatprep.subr.mxu0 %v76
    %365 = vmatpush1.msra.mxu0 %v75
    %366 = vmatprep.subr.mxu0 %v68
    %367 = vmatpush1.msra.mxu0 %v67
    %368 = vmatprep.subr.mxu0 %v60
    %369 = vmatpush1.msra.mxu0 %v59
    %370 = vmatprep.subr.mxu0 %v52
    %371 = vmatpush1.msra.mxu0 %v51
    %372 = vmatprep.subr.mxu0 %v44
    %373 = vmatpush1.msra.mxu0 %v43
    %374 = vmatprep.subr.mxu0 %v36
    %375 = vmatpush1.msra.mxu0 %v35
    %376 = vmatprep.subr.mxu0 0.0
    %377 = vmatpush2.msra.mxu0 0.0
    %378 = vmatprep.subr.mxu0 0.0
    %379 = vmatpush2.msra.mxu0 0.0
    %380 = vmatprep.subr.mxu0 0.0
    %381 = vmatpush2.msra.mxu0 0.0
    %382 = vmatprep.subr.mxu0 0.0
    %383 = vmatpush2.msra.mxu0 0.0
    %384 = vmatprep.subr.mxu0 0.0
    %385 = vmatpush2.msra.mxu0 0.0
    %386 = vmatprep.subr.mxu0 0.0
    %387 = vmatpush2.msra.mxu0 0.0
    %388 = vmatprep.subr.mxu0 0.0
    %389 = vmatpush2.msra.mxu0 0.0
    %390 = vmatprep.subr.mxu0 0.0
    %391 = vmatpush2.msra.mxu0 0.0
    %392 = vmatprep.subr.mxu0 0.0
    %393 = vmatpush2.msra.mxu0 0.0
    %394 = vmatprep.subr.mxu0 0.0
    %395 = vmatpush2.msra.mxu0 0.0
    %396 = vmatprep.subr.mxu0 0.0
    %397 = vmatpush2.msra.mxu0 0.0
    %398 = vmatprep.subr.mxu0 0.0
    %399 = vmatpush2.msra.mxu0 0.0
    %400 = vmatprep.subr.mxu0 0.0
    %401 = vmatpush2.msra.mxu0 0.0
    %402 = vmatprep.subr.mxu0 0.0
    %403 = vmatpush2.msra.mxu0 0.0
    %404 = vmatprep.subr.mxu0 0.0
    %405 = vmatpush2.msra.mxu0 0.0
    %406 = vmatprep.subr.mxu0 0.0
    %407 = vmatpush2.msra.mxu0 0.0
    %408 = vmatprep.mubr.f32.mxu0 0.0
    %409 = vmatmul.mubr.f32.gmra.mxu0 %v159
    %v410 = vpop.f32.mrf.mxu0
    %v411 = vadd.f32 %v181, %v410
    %v412 = vpop.f32.mrf.mxu0
    %v413 = vadd.f32 %v185, %v412
    %414 = vdwg.mxu0
    %415 = vmatprep.subr.mxu0 %v158
    %416 = vmatpush1.msra.mxu0 %v157
    %417 = vmatprep.subr.mxu0 %v150
    %418 = vmatpush1.msra.mxu0 %v149
    %419 = vmatprep.subr.mxu0 %v142
    %420 = vmatpush1.msra.mxu0 %v141
    %421 = vmatprep.subr.mxu0 %v134
    %422 = vmatpush1.msra.mxu0 %v133
    %423 = vmatprep.subr.mxu0 %v126
    %424 = vmatpush1.msra.mxu0 %v125
    %425 = vmatprep.subr.mxu0 %v118
    %426 = vmatpush1.msra.mxu0 %v117
    %427 = vmatprep.subr.mxu0 %v110
    %428 = vmatpush1.msra.mxu0 %v109
    %429 = vmatprep.subr.mxu0 %v102
    %430 = vmatpush1.msra.mxu0 %v101
    %431 = vmatprep.subr.mxu0 %v94
    %432 = vmatpush1.msra.mxu0 %v93
    %433 = vmatprep.subr.mxu0 %v86
    %434 = vmatpush1.msra.mxu0 %v85
    %435 = vmatprep.subr.mxu0 %v78
    %436 = vmatpush1.msra.mxu0 %v77
    %437 = vmatprep.subr.mxu0 %v70
    %438 = vmatpush1.msra.mxu0 %v69
    %439 = vmatprep.subr.mxu0 %v62
    %440 = vmatpush1.msra.mxu0 %v61
    %441 = vmatprep.subr.mxu0 %v54
    %442 = vmatpush1.msra.mxu0 %v53
    %443 = vmatprep.subr.mxu0 %v46
    %444 = vmatpush1.msra.mxu0 %v45
    %445 = vmatprep.subr.mxu0 %v38
    %446 = vmatpush1.msra.mxu0 %v37
    %447 = vmatprep.subr.mxu0 0.0
    %448 = vmatpush2.msra.mxu0 0.0
    %449 = vmatprep.subr.mxu0 0.0
    %450 = vmatpush2.msra.mxu0 0.0
    %451 = vmatprep.subr.mxu0 0.0
    %452 = vmatpush2.msra.mxu0 0.0
    %453 = vmatprep.subr.mxu0 0.0
    %454 = vmatpush2.msra.mxu0 0.0
    %455 = vmatprep.subr.mxu0 0.0
    %456 = vmatpush2.msra.mxu0 0.0
    %457 = vmatprep.subr.mxu0 0.0
    %458 = vmatpush2.msra.mxu0 0.0
    %459 = vmatprep.subr.mxu0 0.0
    %460 = vmatpush2.msra.mxu0 0.0
    %461 = vmatprep.subr.mxu0 0.0
    %462 = vmatpush2.msra.mxu0 0.0
    %463 = vmatprep.subr.mxu0 0.0
    %464 = vmatpush2.msra.mxu0 0.0
    %465 = vmatprep.subr.mxu0 0.0
    %466 = vmatpush2.msra.mxu0 0.0
    %467 = vmatprep.subr.mxu0 0.0
    %468 = vmatpush2.msra.mxu0 0.0
    %469 = vmatprep.subr.mxu0 0.0
    %470 = vmatpush2.msra.mxu0 0.0
    %471 = vmatprep.subr.mxu0 0.0
    %472 = vmatpush2.msra.mxu0 0.0
    %473 = vmatprep.subr.mxu0 0.0
    %474 = vmatpush2.msra.mxu0 0.0
    %475 = vmatprep.subr.mxu0 0.0
    %476 = vmatpush2.msra.mxu0 0.0
    %477 = vmatprep.subr.mxu0 0.0
    %478 = vmatpush2.msra.mxu0 0.0
    %479 = vmatprep.mubr.f32.mxu0 0.0
    %480 = vmatmul.mubr.f32.gmra.mxu0 %v159
    %v481 = vpop.f32.mrf.mxu0
    %v482 = vadd.f32 %v189, %v481
    %v483 = vpop.f32.mrf.mxu0
    %v484 = vadd.f32 %v193, %v483
    %485 = vdwg.mxu0
    %v486 = vld [vmem:[%s3] sm:$0xff]
    %vm487 = vcmp.gt.f32.partialorder %v486, 0.0
    %v488 = vand.u32 2147483647, %v269
    %vm489 = vcmp.le.f32.partialorder %v488, 0.7853982
    %vm490 = vcmp.lt.s32.totalorder %v269, 0
    %v491 = vand.u32 %v269, 2139095040
    %v492 = vshrl.u32 %v491, 23
    %v493 = vsub.s32 %v492, 127
    %v494 = vand.u32 2147483647, %v269
    %v495 = vand.u32 %v494, 8388607
    %v496 = vor.u32 %v495, 8388608
    %v497 = vsub.s32 0, %v496
    %v498 = vadd.s32 %v493, 1
    %vm499 = vcmp.gt.s32.totalorder %v498, 0
    %v500 = vsel %vm499, %v498, 0
    %v501 = vshrl.u32 %v500, 5
    %v502 = vand.u32 %v500, 31
    %v503 = vsub.s32 32, %v502
    %v504 = vshrl.u32 683565275, %v503
    %v505 = vshll.u32 683565275, %v502
    %v506 = vshrl.u32 2475754826, %v503
    %v507 = vor.u32 %v505, %v506
    %v508 = vshll.u32 2475754826, %v502
    %v509 = vshrl.u32 2131351028, %v503
    %v510 = vor.u32 %v508, %v509
    %v511 = vshll.u32 2131351028, %v502
    %v512 = vshrl.u32 2102212464, %v503
    %v513 = vor.u32 %v511, %v512
    %v514 = vshll.u32 2102212464, %v502
    %v515 = vshrl.u32 920167782, %v503
    %v516 = vor.u32 %v514, %v515
    %v517 = vshll.u32 920167782, %v502
    %v518 = vshrl.u32 1326507024, %v503
    %v519 = vor.u32 %v517, %v518
    %vm520 = vcmp.lt.s32.totalorder %v501, 1
    %vm521 = vcmp.lt.s32.totalorder %v501, 2
    %vm522 = vcmp.lt.s32.totalorder %v501, 3
    %vm523 = vcmp.lt.s32.totalorder %v501, 4
    %v524 = vsel %vm520, %v504, %v507
    %v525 = vsel %vm523, %v513, 2102212464
    %v526 = vsel %vm522, %v510, %v525
    %v527 = vsel %vm521, %v524, %v526
    %v528 = vsel %vm520, %v507, %v510
    %v529 = vsel %vm523, %v516, 920167782
    %v530 = vsel %vm522, %v513, %v529
    %v531 = vsel %vm521, %v528, %v530
    %v532 = vsel %vm520, %v510, %v513
    %v533 = vsel %vm523, %v519, 1326507024
    %v534 = vsel %vm522, %v516, %v533
    %v535 = vsel %vm521, %v532, %v534
    %v536 = vshll.u32 %v496, 8
    %v537 = vmul.u32.u64.compose %v536, %v535
    %v538 = vextract.low.u32 %v537
    %v539 = vextract.high.u32 %v537
    %v540 = vmul.u32.u64.compose %v536, %v531
    %v541 = vextract.low.u32 %v540
    %v542 = vextract.high.u32 %v540
    %v543 = vmul.u32 %v536, %v527
    %v544 = vadd.s32 %v539, %v541
    %vm545 = vc.u32 %v539, %v541
    %v546 = vadd.s32 %v542, 1
    %v547 = vsel %vm545, %v546, %v542
    %v548 = vadd.s32 %v543, %v547
    %v549 = vadd.s32 %v548, 536870912
    %v550 = vshrl.u32 %v549, 30
    %v551 = vshll.u32 %v550, 30
    %v552 = vsub.s32 %v548, %v551
    %vm553 = vcmp.lt.s32.totalorder %v552, 0
    %v554 = vsub.s32 0, %v552
    %v555 = vsel %vm553, %v554, %v552
    %v556 = vclz %v555
    %v557 = vsub.s32 %v556, 2
    %vm558 = vcmp.gt.s32.totalorder 0, %v557
    %v559 = vsel %vm558, 0, %v557
    %v560 = vsub.s32 32, %v559
    %v561 = vshll.u32 %v552, %v559
    %v562 = vshrl.u32 %v544, %v560
    %v563 = vor.u32 %v561, %v562
    %v564 = vsub.s32 4294967266, %v559
    %v565 = vadd.s32 %v564, 127
    %v566 = vshll.u32 %v565, 23
    %v567 = vor.u32 4788187, %v566
    %v568 = vand.u32 2147483647, %v567
    %v570 = vcvt.s32.f32 %v563
    %v571 = vmul.f32 %v570, %v568
    %v572 = vxor.u32 %v571, 2147483648
    %v573 = vsel %vm490, %v572, %v571
    %v574 = vsub.s32 4, %v550
    %v575 = vsel %vm490, %v574, %v550
    %v576 = vsel %vm489, %v269, %v573
    %v577 = vsel %vm489, 0, %v575
    %v578 = vcosq.f32.pop %v576
    %v579 = vsinq.f32.pop %v576
    %vm580 = vweird.f32 %v269
    %v581 = vadd.s32 %v577, 3
    %v582 = vand.u32 %v581, 3
    %vm583 = vcmp.lt.s32.totalorder %v582, 2
    %vm584 = vcmp.eq.s32.totalorder %v582, 0
    %v585 = vxor.u32 %v579, 2147483648
    %v586 = vsel %vm584, %v578, %v585
    %vm587 = vcmp.eq.s32.totalorder %v582, 2
    %v588 = vxor.u32 %v578, 2147483648
    %v589 = vsel %vm587, %v588, %v579
    %v590 = vsel %vm583, %v586, %v589
    %v591 = vsel %vm580, nan, %v590
    %v592 = vand.u32 2147483647, %v271
    %vm593 = vcmp.le.f32.partialorder %v592, 0.7853982
    %vm594 = vcmp.lt.s32.totalorder %v271, 0
    %v595 = vand.u32 %v271, 2139095040
    %v596 = vshrl.u32 %v595, 23
    %v597 = vsub.s32 %v596, 127
    %v598 = vand.u32 2147483647, %v271
    %v599 = vand.u32 %v598, 8388607
    %v600 = vor.u32 %v599, 8388608
    %v601 = vsub.s32 0, %v600
    %v602 = vadd.s32 %v597, 1
    %vm603 = vcmp.gt.s32.totalorder %v602, 0
    %v604 = vsel %vm603, %v602, 0
    %v605 = vshrl.u32 %v604, 5
    %v606 = vand.u32 %v604, 31
    %v607 = vsub.s32 32, %v606
    %v608 = vshrl.u32 683565275, %v607
    %v609 = vshll.u32 683565275, %v606
    %v610 = vshrl.u32 2475754826, %v607
    %v611 = vor.u32 %v609, %v610
    %v612 = vshll.u32 2475754826, %v606
    %v613 = vshrl.u32 2131351028, %v607
    %v614 = vor.u32 %v612, %v613
    %v615 = vshll.u32 2131351028, %v606
    %v616 = vshrl.u32 2102212464, %v607
    %v617 = vor.u32 %v615, %v616
    %v618 = vshll.u32 2102212464, %v606
    %v619 = vshrl.u32 920167782, %v607
    %v620 = vor.u32 %v618, %v619
    %v621 = vshll.u32 920167782, %v606
    %v622 = vshrl.u32 1326507024, %v607
    %v623 = vor.u32 %v621, %v622
    %vm624 = vcmp.lt.s32.totalorder %v605, 1
    %vm625 = vcmp.lt.s32.totalorder %v605, 2
    %vm626 = vcmp.lt.s32.totalorder %v605, 3
    %vm627 = vcmp.lt.s32.totalorder %v605, 4
    %v628 = vsel %vm624, %v608, %v611
    %v629 = vsel %vm627, %v617, 2102212464
    %v630 = vsel %vm626, %v614, %v629
    %v631 = vsel %vm625, %v628, %v630
    %v632 = vsel %vm624, %v611, %v614
    %v633 = vsel %vm627, %v620, 920167782
    %v634 = vsel %vm626, %v617, %v633
    %v635 = vsel %vm625, %v632, %v634
    %v636 = vsel %vm624, %v614, %v617
    %v637 = vsel %vm627, %v623, 1326507024
    %v638 = vsel %vm626, %v620, %v637
    %v639 = vsel %vm625, %v636, %v638
    %v640 = vshll.u32 %v600, 8
    %v641 = vmul.u32.u64.compose %v640, %v639
    %v642 = vextract.low.u32 %v641
    %v643 = vextract.high.u32 %v641
    %v644 = vmul.u32.u64.compose %v640, %v635
    %v645 = vextract.low.u32 %v644
    %v646 = vextract.high.u32 %v644
    %v647 = vmul.u32 %v640, %v631
    %v648 = vadd.s32 %v643, %v645
    %vm649 = vc.u32 %v643, %v645
    %v650 = vadd.s32 %v646, 1
    %v651 = vsel %vm649, %v650, %v646
    %v652 = vadd.s32 %v647, %v651
    %v653 = vadd.s32 %v652, 536870912
    %v654 = vshrl.u32 %v653, 30
    %v655 = vshll.u32 %v654, 30
    %v656 = vsub.s32 %v652, %v655
    %vm657 = vcmp.lt.s32.totalorder %v656, 0
    %v658 = vsub.s32 0, %v656
    %v659 = vsel %vm657, %v658, %v656
    %v660 = vclz %v659
    %v661 = vsub.s32 %v660, 2
    %vm662 = vcmp.gt.s32.totalorder 0, %v661
    %v663 = vsel %vm662, 0, %v661
    %v664 = vsub.s32 32, %v663
    %v665 = vshll.u32 %v656, %v663
    %v666 = vshrl.u32 %v648, %v664
    %v667 = vor.u32 %v665, %v666
    %v668 = vsub.s32 4294967266, %v663
    %v669 = vadd.s32 %v668, 127
    %v670 = vshll.u32 %v669, 23
    %v671 = vor.u32 4788187, %v670
    %v672 = vand.u32 2147483647, %v671
    %v674 = vcvt.s32.f32 %v667
    %v675 = vmul.f32 %v674, %v672
    %v676 = vxor.u32 %v675, 2147483648
    %v677 = vsel %vm594, %v676, %v675
    %v678 = vsub.s32 4, %v654
    %v679 = vsel %vm594, %v678, %v654
    %v680 = vsel %vm593, %v271, %v677
    %v681 = vsel %vm593, 0, %v679
    %v682 = vcosq.f32.pop %v680
    %v683 = vsinq.f32.pop %v680
    %vm684 = vweird.f32 %v271
    %v685 = vadd.s32 %v681, 3
    %v686 = vand.u32 %v685, 3
    %vm687 = vcmp.lt.s32.totalorder %v686, 2
    %vm688 = vcmp.eq.s32.totalorder %v686, 0
    %v689 = vxor.u32 %v683, 2147483648
    %v690 = vsel %vm688, %v682, %v689
    %vm691 = vcmp.eq.s32.totalorder %v686, 2
    %v692 = vxor.u32 %v682, 2147483648
    %v693 = vsel %vm691, %v692, %v683
    %v694 = vsel %vm687, %v690, %v693
    %v695 = vsel %vm684, nan, %v694
    %v696 = vand.u32 2147483647, %v340
    %vm697 = vcmp.le.f32.partialorder %v696, 0.7853982
    %vm698 = vcmp.lt.s32.totalorder %v340, 0
    %v699 = vand.u32 %v340, 2139095040
    %v700 = vshrl.u32 %v699, 23
    %v701 = vsub.s32 %v700, 127
    %v702 = vand.u32 2147483647, %v340
    %v703 = vand.u32 %v702, 8388607
    %v704 = vor.u32 %v703, 8388608
    %v705 = vsub.s32 0, %v704
    %v706 = vadd.s32 %v701, 1
    %vm707 = vcmp.gt.s32.totalorder %v706, 0
    %v708 = vsel %vm707, %v706, 0
    %v709 = vshrl.u32 %v708, 5
    %v710 = vand.u32 %v708, 31
    %v711 = vsub.s32 32, %v710
    %v712 = vshrl.u32 683565275, %v711
    %v713 = vshll.u32 683565275, %v710
    %v714 = vshrl.u32 2475754826, %v711
    %v715 = vor.u32 %v713, %v714
    %v716 = vshll.u32 2475754826, %v710
    %v717 = vshrl.u32 2131351028, %v711
    %v718 = vor.u32 %v716, %v717
    %v719 = vshll.u32 2131351028, %v710
    %v720 = vshrl.u32 2102212464, %v711
    %v721 = vor.u32 %v719, %v720
    %v722 = vshll.u32 2102212464, %v710
    %v723 = vshrl.u32 920167782, %v711
    %v724 = vor.u32 %v722, %v723
    %v725 = vshll.u32 920167782, %v710
    %v726 = vshrl.u32 1326507024, %v711
    %v727 = vor.u32 %v725, %v726
    %vm728 = vcmp.lt.s32.totalorder %v709, 1
    %vm729 = vcmp.lt.s32.totalorder %v709, 2
    %vm730 = vcmp.lt.s32.totalorder %v709, 3
    %vm731 = vcmp.lt.s32.totalorder %v709, 4
    %v732 = vsel %vm728, %v712, %v715
    %v733 = vsel %vm731, %v721, 2102212464
    %v734 = vsel %vm730, %v718, %v733
    %v735 = vsel %vm729, %v732, %v734
    %v736 = vsel %vm728, %v715, %v718
    %v737 = vsel %vm731, %v724, 920167782
    %v738 = vsel %vm730, %v721, %v737
    %v739 = vsel %vm729, %v736, %v738
    %v740 = vsel %vm728, %v718, %v721
    %v741 = vsel %vm731, %v727, 1326507024
    %v742 = vsel %vm730, %v724, %v741
    %v743 = vsel %vm729, %v740, %v742
    %v744 = vshll.u32 %v704, 8
    %v745 = vmul.u32.u64.compose %v744, %v743
    %v746 = vextract.low.u32 %v745
    %v747 = vextract.high.u32 %v745
    %v748 = vmul.u32.u64.compose %v744, %v739
    %v749 = vextract.low.u32 %v748
    %v750 = vextract.high.u32 %v748
    %v751 = vmul.u32 %v744, %v735
    %v752 = vadd.s32 %v747, %v749
    %vm753 = vc.u32 %v747, %v749
    %v754 = vadd.s32 %v750, 1
    %v755 = vsel %vm753, %v754, %v750
    %v756 = vadd.s32 %v751, %v755
    %v757 = vadd.s32 %v756, 536870912
    %v758 = vshrl.u32 %v757, 30
    %v759 = vshll.u32 %v758, 30
    %v760 = vsub.s32 %v756, %v759
    %vm761 = vcmp.lt.s32.totalorder %v760, 0
    %v762 = vsub.s32 0, %v760
    %v763 = vsel %vm761, %v762, %v760
    %v764 = vclz %v763
    %v765 = vsub.s32 %v764, 2
    %vm766 = vcmp.gt.s32.totalorder 0, %v765
    %v767 = vsel %vm766, 0, %v765
    %v768 = vsub.s32 32, %v767
    %v769 = vshll.u32 %v760, %v767
    %v770 = vshrl.u32 %v752, %v768
    %v771 = vor.u32 %v769, %v770
    %v772 = vsub.s32 4294967266, %v767
    %v773 = vadd.s32 %v772, 127
    %v774 = vshll.u32 %v773, 23
    %v775 = vor.u32 4788187, %v774
    %v776 = vand.u32 2147483647, %v775
    %v778 = vcvt.s32.f32 %v771
    %v779 = vmul.f32 %v778, %v776
    %v780 = vxor.u32 %v779, 2147483648
    %v781 = vsel %vm698, %v780, %v779
    %v782 = vsub.s32 4, %v758
    %v783 = vsel %vm698, %v782, %v758
    %v784 = vsel %vm697, %v340, %v781
    %v785 = vsel %vm697, 0, %v783
    %v786 = vcosq.f32.pop %v784
    %v787 = vsinq.f32.pop %v784
    %vm788 = vweird.f32 %v340
    %v789 = vadd.s32 %v785, 3
    %v790 = vand.u32 %v789, 3
    %vm791 = vcmp.lt.s32.totalorder %v790, 2
    %vm792 = vcmp.eq.s32.totalorder %v790, 0
    %v793 = vxor.u32 %v787, 2147483648
    %v794 = vsel %vm792, %v786, %v793
    %vm795 = vcmp.eq.s32.totalorder %v790, 2
    %v796 = vxor.u32 %v786, 2147483648
    %v797 = vsel %vm795, %v796, %v787
    %v798 = vsel %vm791, %v794, %v797
    %v799 = vsel %vm788, nan, %v798
    %v800 = vand.u32 2147483647, %v342
    %vm801 = vcmp.le.f32.partialorder %v800, 0.7853982
    %vm802 = vcmp.lt.s32.totalorder %v342, 0
    %v803 = vand.u32 %v342, 2139095040
    %v804 = vshrl.u32 %v803, 23
    %v805 = vsub.s32 %v804, 127
    %v806 = vand.u32 2147483647, %v342
    %v807 = vand.u32 %v806, 8388607
    %v808 = vor.u32 %v807, 8388608
    %v809 = vsub.s32 0, %v808
    %v810 = vadd.s32 %v805, 1
    %vm811 = vcmp.gt.s32.totalorder %v810, 0
    %v812 = vsel %vm811, %v810, 0
    %v813 = vshrl.u32 %v812, 5
    %v814 = vand.u32 %v812, 31
    %v815 = vsub.s32 32, %v814
    %v816 = vshrl.u32 683565275, %v815
    %v817 = vshll.u32 683565275, %v814
    %v818 = vshrl.u32 2475754826, %v815
    %v819 = vor.u32 %v817, %v818
    %v820 = vshll.u32 2475754826, %v814
    %v821 = vshrl.u32 2131351028, %v815
    %v822 = vor.u32 %v820, %v821
    %v823 = vshll.u32 2131351028, %v814
    %v824 = vshrl.u32 2102212464, %v815
    %v825 = vor.u32 %v823, %v824
    %v826 = vshll.u32 2102212464, %v814
    %v827 = vshrl.u32 920167782, %v815
    %v828 = vor.u32 %v826, %v827
    %v829 = vshll.u32 920167782, %v814
    %v830 = vshrl.u32 1326507024, %v815
    %v831 = vor.u32 %v829, %v830
    %vm832 = vcmp.lt.s32.totalorder %v813, 1
    %vm833 = vcmp.lt.s32.totalorder %v813, 2
    %vm834 = vcmp.lt.s32.totalorder %v813, 3
    %vm835 = vcmp.lt.s32.totalorder %v813, 4
    %v836 = vsel %vm832, %v816, %v819
    %v837 = vsel %vm835, %v825, 2102212464
    %v838 = vsel %vm834, %v822, %v837
    %v839 = vsel %vm833, %v836, %v838
    %v840 = vsel %vm832, %v819, %v822
    %v841 = vsel %vm835, %v828, 920167782
    %v842 = vsel %vm834, %v825, %v841
    %v843 = vsel %vm833, %v840, %v842
    %v844 = vsel %vm832, %v822, %v825
    %v845 = vsel %vm835, %v831, 1326507024
    %v846 = vsel %vm834, %v828, %v845
    %v847 = vsel %vm833, %v844, %v846
    %v848 = vshll.u32 %v808, 8
    %v849 = vmul.u32.u64.compose %v848, %v847
    %v850 = vextract.low.u32 %v849
    %v851 = vextract.high.u32 %v849
    %v852 = vmul.u32.u64.compose %v848, %v843
    %v853 = vextract.low.u32 %v852
    %v854 = vextract.high.u32 %v852
    %v855 = vmul.u32 %v848, %v839
    %v856 = vadd.s32 %v851, %v853
    %vm857 = vc.u32 %v851, %v853
    %v858 = vadd.s32 %v854, 1
    %v859 = vsel %vm857, %v858, %v854
    %v860 = vadd.s32 %v855, %v859
    %v861 = vadd.s32 %v860, 536870912
    %v862 = vshrl.u32 %v861, 30
    %v863 = vshll.u32 %v862, 30
    %v864 = vsub.s32 %v860, %v863
    %vm865 = vcmp.lt.s32.totalorder %v864, 0
    %v866 = vsub.s32 0, %v864
    %v867 = vsel %vm865, %v866, %v864
    %v868 = vclz %v867
    %v869 = vsub.s32 %v868, 2
    %vm870 = vcmp.gt.s32.totalorder 0, %v869
    %v871 = vsel %vm870, 0, %v869
    %v872 = vsub.s32 32, %v871
    %v873 = vshll.u32 %v864, %v871
    %v874 = vshrl.u32 %v856, %v872
    %v875 = vor.u32 %v873, %v874
    %v876 = vsub.s32 4294967266, %v871
    %v877 = vadd.s32 %v876, 127
    %v878 = vshll.u32 %v877, 23
    %v879 = vor.u32 4788187, %v878
    %v880 = vand.u32 2147483647, %v879
    %v882 = vcvt.s32.f32 %v875
    %v883 = vmul.f32 %v882, %v880
    %v884 = vxor.u32 %v883, 2147483648
    %v885 = vsel %vm802, %v884, %v883
    %v886 = vsub.s32 4, %v862
    %v887 = vsel %vm802, %v886, %v862
    %v888 = vsel %vm801, %v342, %v885
    %v889 = vsel %vm801, 0, %v887
    %v890 = vcosq.f32.pop %v888
    %v891 = vsinq.f32.pop %v888
    %vm892 = vweird.f32 %v342
    %v893 = vadd.s32 %v889, 3
    %v894 = vand.u32 %v893, 3
    %vm895 = vcmp.lt.s32.totalorder %v894, 2
    %vm896 = vcmp.eq.s32.totalorder %v894, 0
    %v897 = vxor.u32 %v891, 2147483648
    %v898 = vsel %vm896, %v890, %v897
    %vm899 = vcmp.eq.s32.totalorder %v894, 2
    %v900 = vxor.u32 %v890, 2147483648
    %v901 = vsel %vm899, %v900, %v891
    %v902 = vsel %vm895, %v898, %v901
    %v903 = vsel %vm892, nan, %v902
    %v904 = vand.u32 2147483647, %v411
    %vm905 = vcmp.le.f32.partialorder %v904, 0.7853982
    %vm906 = vcmp.lt.s32.totalorder %v411, 0
    %v907 = vand.u32 %v411, 2139095040
    %v908 = vshrl.u32 %v907, 23
    %v909 = vsub.s32 %v908, 127
    %v910 = vand.u32 2147483647, %v411
    %v911 = vand.u32 %v910, 8388607
    %v912 = vor.u32 %v911, 8388608
    %v913 = vsub.s32 0, %v912
    %v914 = vadd.s32 %v909, 1
    %vm915 = vcmp.gt.s32.totalorder %v914, 0
    %v916 = vsel %vm915, %v914, 0
    %v917 = vshrl.u32 %v916, 5
    %v918 = vand.u32 %v916, 31
    %v919 = vsub.s32 32, %v918
    %v920 = vshrl.u32 683565275, %v919
    %v921 = vshll.u32 683565275, %v918
    %v922 = vshrl.u32 2475754826, %v919
    %v923 = vor.u32 %v921, %v922
    %v924 = vshll.u32 2475754826, %v918
    %v925 = vshrl.u32 2131351028, %v919
    %v926 = vor.u32 %v924, %v925
    %v927 = vshll.u32 2131351028, %v918
    %v928 = vshrl.u32 2102212464, %v919
    %v929 = vor.u32 %v927, %v928
    %v930 = vshll.u32 2102212464, %v918
    %v931 = vshrl.u32 920167782, %v919
    %v932 = vor.u32 %v930, %v931
    %v933 = vshll.u32 920167782, %v918
    %v934 = vshrl.u32 1326507024, %v919
    %v935 = vor.u32 %v933, %v934
    %vm936 = vcmp.lt.s32.totalorder %v917, 1
    %vm937 = vcmp.lt.s32.totalorder %v917, 2
    %vm938 = vcmp.lt.s32.totalorder %v917, 3
    %vm939 = vcmp.lt.s32.totalorder %v917, 4
    %v940 = vsel %vm936, %v920, %v923
    %v941 = vsel %vm939, %v929, 2102212464
    %v942 = vsel %vm938, %v926, %v941
    %v943 = vsel %vm937, %v940, %v942
    %v944 = vsel %vm936, %v923, %v926
    %v945 = vsel %vm939, %v932, 920167782
    %v946 = vsel %vm938, %v929, %v945
    %v947 = vsel %vm937, %v944, %v946
    %v948 = vsel %vm936, %v926, %v929
    %v949 = vsel %vm939, %v935, 1326507024
    %v950 = vsel %vm938, %v932, %v949
    %v951 = vsel %vm937, %v948, %v950
    %v952 = vshll.u32 %v912, 8
    %v953 = vmul.u32.u64.compose %v952, %v951
    %v954 = vextract.low.u32 %v953
    %v955 = vextract.high.u32 %v953
    %v956 = vmul.u32.u64.compose %v952, %v947
    %v957 = vextract.low.u32 %v956
    %v958 = vextract.high.u32 %v956
    %v959 = vmul.u32 %v952, %v943
    %v960 = vadd.s32 %v955, %v957
    %vm961 = vc.u32 %v955, %v957
    %v962 = vadd.s32 %v958, 1
    %v963 = vsel %vm961, %v962, %v958
    %v964 = vadd.s32 %v959, %v963
    %v965 = vadd.s32 %v964, 536870912
    %v966 = vshrl.u32 %v965, 30
    %v967 = vshll.u32 %v966, 30
    %v968 = vsub.s32 %v964, %v967
    %vm969 = vcmp.lt.s32.totalorder %v968, 0
    %v970 = vsub.s32 0, %v968
    %v971 = vsel %vm969, %v970, %v968
    %v972 = vclz %v971
    %v973 = vsub.s32 %v972, 2
    %vm974 = vcmp.gt.s32.totalorder 0, %v973
    %v975 = vsel %vm974, 0, %v973
    %v976 = vsub.s32 32, %v975
    %v977 = vshll.u32 %v968, %v975
    %v978 = vshrl.u32 %v960, %v976
    %v979 = vor.u32 %v977, %v978
    %v980 = vsub.s32 4294967266, %v975
    %v981 = vadd.s32 %v980, 127
    %v982 = vshll.u32 %v981, 23
    %v983 = vor.u32 4788187, %v982
    %v984 = vand.u32 2147483647, %v983
    %v986 = vcvt.s32.f32 %v979
    %v987 = vmul.f32 %v986, %v984
    %v988 = vxor.u32 %v987, 2147483648
    %v989 = vsel %vm906, %v988, %v987
    %v990 = vsub.s32 4, %v966
    %v991 = vsel %vm906, %v990, %v966
    %v992 = vsel %vm905, %v411, %v989
    %v993 = vsel %vm905, 0, %v991
    %v994 = vcosq.f32.pop %v992
    %v995 = vsinq.f32.pop %v992
    %vm996 = vweird.f32 %v411
    %v997 = vadd.s32 %v993, 3
    %v998 = vand.u32 %v997, 3
    %vm999 = vcmp.lt.s32.totalorder %v998, 2
    %vm1000 = vcmp.eq.s32.totalorder %v998, 0
    %v1001 = vxor.u32 %v995, 2147483648
    %v1002 = vsel %vm1000, %v994, %v1001
    %vm1003 = vcmp.eq.s32.totalorder %v998, 2
    %v1004 = vxor.u32 %v994, 2147483648
    %v1005 = vsel %vm1003, %v1004, %v995
    %v1006 = vsel %vm999, %v1002, %v1005
    %v1007 = vsel %vm996, nan, %v1006
    %v1008 = vand.u32 2147483647, %v413
    %vm1009 = vcmp.le.f32.partialorder %v1008, 0.7853982
    %vm1010 = vcmp.lt.s32.totalorder %v413, 0
    %v1011 = vand.u32 %v413, 2139095040
    %v1012 = vshrl.u32 %v1011, 23
    %v1013 = vsub.s32 %v1012, 127
    %v1014 = vand.u32 2147483647, %v413
    %v1015 = vand.u32 %v1014, 8388607
    %v1016 = vor.u32 %v1015, 8388608
    %v1017 = vsub.s32 0, %v1016
    %v1018 = vadd.s32 %v1013, 1
    %vm1019 = vcmp.gt.s32.totalorder %v1018, 0
    %v1020 = vsel %vm1019, %v1018, 0
    %v1021 = vshrl.u32 %v1020, 5
    %v1022 = vand.u32 %v1020, 31
    %v1023 = vsub.s32 32, %v1022
    %v1024 = vshrl.u32 683565275, %v1023
    %v1025 = vshll.u32 683565275, %v1022
    %v1026 = vshrl.u32 2475754826, %v1023
    %v1027 = vor.u32 %v1025, %v1026
    %v1028 = vshll.u32 2475754826, %v1022
    %v1029 = vshrl.u32 2131351028, %v1023
    %v1030 = vor.u32 %v1028, %v1029
    %v1031 = vshll.u32 2131351028, %v1022
    %v1032 = vshrl.u32 2102212464, %v1023
    %v1033 = vor.u32 %v1031, %v1032
    %v1034 = vshll.u32 2102212464, %v1022
    %v1035 = vshrl.u32 920167782, %v1023
    %v1036 = vor.u32 %v1034, %v1035
    %v1037 = vshll.u32 920167782, %v1022
    %v1038 = vshrl.u32 1326507024, %v1023
    %v1039 = vor.u32 %v1037, %v1038
    %vm1040 = vcmp.lt.s32.totalorder %v1021, 1
    %vm1041 = vcmp.lt.s32.totalorder %v1021, 2
    %vm1042 = vcmp.lt.s32.totalorder %v1021, 3
    %vm1043 = vcmp.lt.s32.totalorder %v1021, 4
    %v1044 = vsel %vm1040, %v1024, %v1027
    %v1045 = vsel %vm1043, %v1033, 2102212464
    %v1046 = vsel %vm1042, %v1030, %v1045
    %v1047 = vsel %vm1041, %v1044, %v1046
    %v1048 = vsel %vm1040, %v1027, %v1030
    %v1049 = vsel %vm1043, %v1036, 920167782
    %v1050 = vsel %vm1042, %v1033, %v1049
    %v1051 = vsel %vm1041, %v1048, %v1050
    %v1052 = vsel %vm1040, %v1030, %v1033
    %v1053 = vsel %vm1043, %v1039, 1326507024
    %v1054 = vsel %vm1042, %v1036, %v1053
    %v1055 = vsel %vm1041, %v1052, %v1054
    %v1056 = vshll.u32 %v1016, 8
    %v1057 = vmul.u32.u64.compose %v1056, %v1055
    %v1058 = vextract.low.u32 %v1057
    %v1059 = vextract.high.u32 %v1057
    %v1060 = vmul.u32.u64.compose %v1056, %v1051
    %v1061 = vextract.low.u32 %v1060
    %v1062 = vextract.high.u32 %v1060
    %v1063 = vmul.u32 %v1056, %v1047
    %v1064 = vadd.s32 %v1059, %v1061
    %vm1065 = vc.u32 %v1059, %v1061
    %v1066 = vadd.s32 %v1062, 1
    %v1067 = vsel %vm1065, %v1066, %v1062
    %v1068 = vadd.s32 %v1063, %v1067
    %v1069 = vadd.s32 %v1068, 536870912
    %v1070 = vshrl.u32 %v1069, 30
    %v1071 = vshll.u32 %v1070, 30
    %v1072 = vsub.s32 %v1068, %v1071
    %vm1073 = vcmp.lt.s32.totalorder %v1072, 0
    %v1074 = vsub.s32 0, %v1072
    %v1075 = vsel %vm1073, %v1074, %v1072
    %v1076 = vclz %v1075
    %v1077 = vsub.s32 %v1076, 2
    %vm1078 = vcmp.gt.s32.totalorder 0, %v1077
    %v1079 = vsel %vm1078, 0, %v1077
    %v1080 = vsub.s32 32, %v1079
    %v1081 = vshll.u32 %v1072, %v1079
    %v1082 = vshrl.u32 %v1064, %v1080
    %v1083 = vor.u32 %v1081, %v1082
    %v1084 = vsub.s32 4294967266, %v1079
    %v1085 = vadd.s32 %v1084, 127
    %v1086 = vshll.u32 %v1085, 23
    %v1087 = vor.u32 4788187, %v1086
    %v1088 = vand.u32 2147483647, %v1087
    %v1090 = vcvt.s32.f32 %v1083
    %v1091 = vmul.f32 %v1090, %v1088
    %v1092 = vxor.u32 %v1091, 2147483648
    %v1093 = vsel %vm1010, %v1092, %v1091
    %v1094 = vsub.s32 4, %v1070
    %v1095 = vsel %vm1010, %v1094, %v1070
    %v1096 = vsel %vm1009, %v413, %v1093
    %v1097 = vsel %vm1009, 0, %v1095
    %v1098 = vcosq.f32.pop %v1096
    %v1099 = vsinq.f32.pop %v1096
    %vm1100 = vweird.f32 %v413
    %v1101 = vadd.s32 %v1097, 3
    %v1102 = vand.u32 %v1101, 3
    %vm1103 = vcmp.lt.s32.totalorder %v1102, 2
    %vm1104 = vcmp.eq.s32.totalorder %v1102, 0
    %v1105 = vxor.u32 %v1099, 2147483648
    %v1106 = vsel %vm1104, %v1098, %v1105
    %vm1107 = vcmp.eq.s32.totalorder %v1102, 2
    %v1108 = vxor.u32 %v1098, 2147483648
    %v1109 = vsel %vm1107, %v1108, %v1099
    %v1110 = vsel %vm1103, %v1106, %v1109
    %v1111 = vsel %vm1100, nan, %v1110
    %v1112 = vand.u32 2147483647, %v482
    %vm1113 = vcmp.le.f32.partialorder %v1112, 0.7853982
    %vm1114 = vcmp.lt.s32.totalorder %v482, 0
    %v1115 = vand.u32 %v482, 2139095040
    %v1116 = vshrl.u32 %v1115, 23
    %v1117 = vsub.s32 %v1116, 127
    %v1118 = vand.u32 2147483647, %v482
    %v1119 = vand.u32 %v1118, 8388607
    %v1120 = vor.u32 %v1119, 8388608
    %v1121 = vsub.s32 0, %v1120
    %v1122 = vadd.s32 %v1117, 1
    %vm1123 = vcmp.gt.s32.totalorder %v1122, 0
    %v1124 = vsel %vm1123, %v1122, 0
    %v1125 = vshrl.u32 %v1124, 5
    %v1126 = vand.u32 %v1124, 31
    %v1127 = vsub.s32 32, %v1126
    %v1128 = vshrl.u32 683565275, %v1127
    %v1129 = vshll.u32 683565275, %v1126
    %v1130 = vshrl.u32 2475754826, %v1127
    %v1131 = vor.u32 %v1129, %v1130
    %v1132 = vshll.u32 2475754826, %v1126
    %v1133 = vshrl.u32 2131351028, %v1127
    %v1134 = vor.u32 %v1132, %v1133
    %v1135 = vshll.u32 2131351028, %v1126
    %v1136 = vshrl.u32 2102212464, %v1127
    %v1137 = vor.u32 %v1135, %v1136
    %v1138 = vshll.u32 2102212464, %v1126
    %v1139 = vshrl.u32 920167782, %v1127
    %v1140 = vor.u32 %v1138, %v1139
    %v1141 = vshll.u32 920167782, %v1126
    %v1142 = vshrl.u32 1326507024, %v1127
    %v1143 = vor.u32 %v1141, %v1142
    %vm1144 = vcmp.lt.s32.totalorder %v1125, 1
    %vm1145 = vcmp.lt.s32.totalorder %v1125, 2
    %vm1146 = vcmp.lt.s32.totalorder %v1125, 3
    %vm1147 = vcmp.lt.s32.totalorder %v1125, 4
    %v1148 = vsel %vm1144, %v1128, %v1131
    %v1149 = vsel %vm1147, %v1137, 2102212464
    %v1150 = vsel %vm1146, %v1134, %v1149
    %v1151 = vsel %vm1145, %v1148, %v1150
    %v1152 = vsel %vm1144, %v1131, %v1134
    %v1153 = vsel %vm1147, %v1140, 920167782
    %v1154 = vsel %vm1146, %v1137, %v1153
    %v1155 = vsel %vm1145, %v1152, %v1154
    %v1156 = vsel %vm1144, %v1134, %v1137
    %v1157 = vsel %vm1147, %v1143, 1326507024
    %v1158 = vsel %vm1146, %v1140, %v1157
    %v1159 = vsel %vm1145, %v1156, %v1158
    %v1160 = vshll.u32 %v1120, 8
    %v1161 = vmul.u32.u64.compose %v1160, %v1159
    %v1162 = vextract.low.u32 %v1161
    %v1163 = vextract.high.u32 %v1161
    %v1164 = vmul.u32.u64.compose %v1160, %v1155
    %v1165 = vextract.low.u32 %v1164
    %v1166 = vextract.high.u32 %v1164
    %v1167 = vmul.u32 %v1160, %v1151
    %v1168 = vadd.s32 %v1163, %v1165
    %vm1169 = vc.u32 %v1163, %v1165
    %v1170 = vadd.s32 %v1166, 1
    %v1171 = vsel %vm1169, %v1170, %v1166
    %v1172 = vadd.s32 %v1167, %v1171
    %v1173 = vadd.s32 %v1172, 536870912
    %v1174 = vshrl.u32 %v1173, 30
    %v1175 = vshll.u32 %v1174, 30
    %v1176 = vsub.s32 %v1172, %v1175
    %vm1177 = vcmp.lt.s32.totalorder %v1176, 0
    %v1178 = vsub.s32 0, %v1176
    %v1179 = vsel %vm1177, %v1178, %v1176
    %v1180 = vclz %v1179
    %v1181 = vsub.s32 %v1180, 2
    %vm1182 = vcmp.gt.s32.totalorder 0, %v1181
    %v1183 = vsel %vm1182, 0, %v1181
    %v1184 = vsub.s32 32, %v1183
    %v1185 = vshll.u32 %v1176, %v1183
    %v1186 = vshrl.u32 %v1168, %v1184
    %v1187 = vor.u32 %v1185, %v1186
    %v1188 = vsub.s32 4294967266, %v1183
    %v1189 = vadd.s32 %v1188, 127
    %v1190 = vshll.u32 %v1189, 23
    %v1191 = vor.u32 4788187, %v1190
    %v1192 = vand.u32 2147483647, %v1191
    %v1194 = vcvt.s32.f32 %v1187
    %v1195 = vmul.f32 %v1194, %v1192
    %v1196 = vxor.u32 %v1195, 2147483648
    %v1197 = vsel %vm1114, %v1196, %v1195
    %v1198 = vsub.s32 4, %v1174
    %v1199 = vsel %vm1114, %v1198, %v1174
    %v1200 = vsel %vm1113, %v482, %v1197
    %v1201 = vsel %vm1113, 0, %v1199
    %v1202 = vcosq.f32.pop %v1200
    %v1203 = vsinq.f32.pop %v1200
    %vm1204 = vweird.f32 %v482
    %v1205 = vadd.s32 %v1201, 3
    %v1206 = vand.u32 %v1205, 3
    %vm1207 = vcmp.lt.s32.totalorder %v1206, 2
    %vm1208 = vcmp.eq.s32.totalorder %v1206, 0
    %v1209 = vxor.u32 %v1203, 2147483648
    %v1210 = vsel %vm1208, %v1202, %v1209
    %vm1211 = vcmp.eq.s32.totalorder %v1206, 2
    %v1212 = vxor.u32 %v1202, 2147483648
    %v1213 = vsel %vm1211, %v1212, %v1203
    %v1214 = vsel %vm1207, %v1210, %v1213
    %v1215 = vsel %vm1204, nan, %v1214
    %v1216 = vand.u32 2147483647, %v484
    %vm1217 = vcmp.le.f32.partialorder %v1216, 0.7853982
    %vm1218 = vcmp.lt.s32.totalorder %v484, 0
    %v1219 = vand.u32 %v484, 2139095040
    %v1220 = vshrl.u32 %v1219, 23
    %v1221 = vsub.s32 %v1220, 127
    %v1222 = vand.u32 2147483647, %v484
    %v1223 = vand.u32 %v1222, 8388607
    %v1224 = vor.u32 %v1223, 8388608
    %v1225 = vsub.s32 0, %v1224
    %v1226 = vadd.s32 %v1221, 1
    %vm1227 = vcmp.gt.s32.totalorder %v1226, 0
    %v1228 = vsel %vm1227, %v1226, 0
    %v1229 = vshrl.u32 %v1228, 5
    %v1230 = vand.u32 %v1228, 31
    %v1231 = vsub.s32 32, %v1230
    %v1232 = vshrl.u32 683565275, %v1231
    %v1233 = vshll.u32 683565275, %v1230
    %v1234 = vshrl.u32 2475754826, %v1231
    %v1235 = vor.u32 %v1233, %v1234
    %v1236 = vshll.u32 2475754826, %v1230
    %v1237 = vshrl.u32 2131351028, %v1231
    %v1238 = vor.u32 %v1236, %v1237
    %v1239 = vshll.u32 2131351028, %v1230
    %v1240 = vshrl.u32 2102212464, %v1231
    %v1241 = vor.u32 %v1239, %v1240
    %v1242 = vshll.u32 2102212464, %v1230
    %v1243 = vshrl.u32 920167782, %v1231
    %v1244 = vor.u32 %v1242, %v1243
    %v1245 = vshll.u32 920167782, %v1230
    %v1246 = vshrl.u32 1326507024, %v1231
    %v1247 = vor.u32 %v1245, %v1246
    %vm1248 = vcmp.lt.s32.totalorder %v1229, 1
    %vm1249 = vcmp.lt.s32.totalorder %v1229, 2
    %vm1250 = vcmp.lt.s32.totalorder %v1229, 3
    %vm1251 = vcmp.lt.s32.totalorder %v1229, 4
    %v1252 = vsel %vm1248, %v1232, %v1235
    %v1253 = vsel %vm1251, %v1241, 2102212464
    %v1254 = vsel %vm1250, %v1238, %v1253
    %v1255 = vsel %vm1249, %v1252, %v1254
    %v1256 = vsel %vm1248, %v1235, %v1238
    %v1257 = vsel %vm1251, %v1244, 920167782
    %v1258 = vsel %vm1250, %v1241, %v1257
    %v1259 = vsel %vm1249, %v1256, %v1258
    %v1260 = vsel %vm1248, %v1238, %v1241
    %v1261 = vsel %vm1251, %v1247, 1326507024
    %v1262 = vsel %vm1250, %v1244, %v1261
    %v1263 = vsel %vm1249, %v1260, %v1262
    %v1264 = vshll.u32 %v1224, 8
    %v1265 = vmul.u32.u64.compose %v1264, %v1263
    %v1266 = vextract.low.u32 %v1265
    %v1267 = vextract.high.u32 %v1265
    %v1268 = vmul.u32.u64.compose %v1264, %v1259
    %v1269 = vextract.low.u32 %v1268
    %v1270 = vextract.high.u32 %v1268
    %v1271 = vmul.u32 %v1264, %v1255
    %v1272 = vadd.s32 %v1267, %v1269
    %vm1273 = vc.u32 %v1267, %v1269
    %v1274 = vadd.s32 %v1270, 1
    %v1275 = vsel %vm1273, %v1274, %v1270
    %v1276 = vadd.s32 %v1271, %v1275
    %v1277 = vadd.s32 %v1276, 536870912
    %v1278 = vshrl.u32 %v1277, 30
    %v1279 = vshll.u32 %v1278, 30
    %v1280 = vsub.s32 %v1276, %v1279
    %vm1281 = vcmp.lt.s32.totalorder %v1280, 0
    %v1282 = vsub.s32 0, %v1280
    %v1283 = vsel %vm1281, %v1282, %v1280
    %v1284 = vclz %v1283
    %v1285 = vsub.s32 %v1284, 2
    %vm1286 = vcmp.gt.s32.totalorder 0, %v1285
    %v1287 = vsel %vm1286, 0, %v1285
    %v1288 = vsub.s32 32, %v1287
    %v1289 = vshll.u32 %v1280, %v1287
    %v1290 = vshrl.u32 %v1272, %v1288
    %v1291 = vor.u32 %v1289, %v1290
    %v1292 = vsub.s32 4294967266, %v1287
    %v1293 = vadd.s32 %v1292, 127
    %v1294 = vshll.u32 %v1293, 23
    %v1295 = vor.u32 4788187, %v1294
    %v1296 = vand.u32 2147483647, %v1295
    %v1298 = vcvt.s32.f32 %v1291
    %v1299 = vmul.f32 %v1298, %v1296
    %v1300 = vxor.u32 %v1299, 2147483648
    %v1301 = vsel %vm1218, %v1300, %v1299
    %v1302 = vsub.s32 4, %v1278
    %v1303 = vsel %vm1218, %v1302, %v1278
    %v1304 = vsel %vm1217, %v484, %v1301
    %v1305 = vsel %vm1217, 0, %v1303
    %v1306 = vcosq.f32.pop %v1304
    %v1307 = vsinq.f32.pop %v1304
    %vm1308 = vweird.f32 %v484
    %v1309 = vadd.s32 %v1305, 3
    %v1310 = vand.u32 %v1309, 3
    %vm1311 = vcmp.lt.s32.totalorder %v1310, 2
    %vm1312 = vcmp.eq.s32.totalorder %v1310, 0
    %v1313 = vxor.u32 %v1307, 2147483648
    %v1314 = vsel %vm1312, %v1306, %v1313
    %vm1315 = vcmp.eq.s32.totalorder %v1310, 2
    %v1316 = vxor.u32 %v1306, 2147483648
    %v1317 = vsel %vm1315, %v1316, %v1307
    %v1318 = vsel %vm1311, %v1314, %v1317
    %v1319 = vsel %vm1308, nan, %v1318
    %v1320 = vsel %vm487, 1, 0
    %v1321 = vlaneseq
    %v1322 = vshrl.u32 %v1321, 7
    %v1323 = vsub.s32 0, %v1322
    %v1324 = vrot.slane %v1320, %v1323
    %v1325 = vlaneseq
    %v1326 = vshrl.u32 %v1325, 7
    %v1327 = vsub.s32 1, %v1326
    %v1328 = vrot.slane %v1320, %v1327
    %v1329 = vlaneseq
    %v1330 = vshrl.u32 %v1329, 7
    %v1331 = vsub.s32 2, %v1330
    %v1332 = vrot.slane %v1320, %v1331
    %v1333 = vlaneseq
    %v1334 = vshrl.u32 %v1333, 7
    %v1335 = vsub.s32 3, %v1334
    %v1336 = vrot.slane %v1320, %v1335
    %v1337 = vlaneseq
    %v1338 = vshrl.u32 %v1337, 7
    %v1339 = vsub.s32 4, %v1338
    %v1340 = vrot.slane %v1320, %v1339
    %v1341 = vlaneseq
    %v1342 = vshrl.u32 %v1341, 7
    %v1343 = vsub.s32 5, %v1342
    %v1344 = vrot.slane %v1320, %v1343
    %v1345 = vlaneseq
    %v1346 = vshrl.u32 %v1345, 7
    %v1347 = vsub.s32 6, %v1346
    %v1348 = vrot.slane %v1320, %v1347
    %v1349 = vlaneseq
    %v1350 = vshrl.u32 %v1349, 7
    %v1351 = vsub.s32 7, %v1350
    %v1352 = vrot.slane %v1320, %v1351
    %vm1353 = vcmp.eq.s32.totalorder %v1324, 1
    %vm1354 = vcmp.eq.s32.totalorder %v1328, 1
    %vm1355 = vcmp.eq.s32.totalorder %v1332, 1
    %vm1356 = vcmp.eq.s32.totalorder %v1336, 1
    %vm1357 = vcmp.eq.s32.totalorder %v1340, 1
    %vm1358 = vcmp.eq.s32.totalorder %v1344, 1
    %vm1359 = vcmp.eq.s32.totalorder %v1348, 1
    %vm1360 = vcmp.eq.s32.totalorder %v1352, 1
    %v1361 = vsel %vm1353, %v269, %v591
    %v1362 = vsel %vm1354, %v271, %v695
    %v1363 = vsel %vm1355, %v340, %v799
    %v1364 = vsel %vm1356, %v342, %v903
    %v1365 = vsel %vm1357, %v411, %v1007
    %v1366 = vsel %vm1358, %v413, %v1111
    %v1367 = vsel %vm1359, %v482, %v1215
    %v1368 = vsel %vm1360, %v484, %v1319
    %1369 = vst [vmem:[%s4] sm:$0xff] %v1361
    %1370 = vst [vmem:[%s4 + $0x8] sm:$0xff] %v1362
    %1371 = vst [vmem:[%s4 + $0x10] sm:$0xff] %v1363
    %1372 = vst [vmem:[%s4 + $0x18] sm:$0xff] %v1364
    %1373 = vst [vmem:[%s4 + $0x20] sm:$0xff] %v1365
    %1374 = vst [vmem:[%s4 + $0x28] sm:$0xff] %v1366
    %1375 = vst [vmem:[%s4 + $0x30] sm:$0xff] %v1367
    %1376 = vst [vmem:[%s4 + $0x38] sm:$0xff] %v1368
    // Predicated region
    $region22: #{time2vec_pallas.1} parent=1 // pred_check
      _
    $region23: #{time2vec_pallas.1} parent=1 // pred_check_branch
      %1378 = sbr.rel (0) target = $region25
    $region24: #{time2vec_pallas.1} parent=1 // pred_region
      _
    $region25: #{time2vec_pallas.1} parent=1 // pred_fallthru
      _
    // Predicated region
    $region26: #{time2vec_pallas.1} parent=1 // pred_check
      _
    $region27: #{time2vec_pallas.1} parent=1 // pred_check_branch
      %1380 = sbr.rel (0) target = $region29
    $region28: #{time2vec_pallas.1} parent=1 // pred_region
      _
    $region29: #{time2vec_pallas.1} parent=1 // pred_fallthru
      _
    %1381 = vsyncpa [#allocation3], 1

</llo_original>
